<compile_context>
chip_gen: v6e
topology: v6e:2x2x1
jax: 0.10.0
libtpu: 0.0.40
codegen_flags: <defaults>
</compile_context>

<pallas_src>
import math

import jax
import jax.numpy as jnp
from jax.experimental import pallas as pl
from jax.experimental.pallas import tpu as pltpu


def _prelu(x, alpha):
    return jnp.where(x >= 0, x, alpha * x)


def _wide_mxu_available():
    """True on chips with a 256x256 MXU (v6e / v7x); False on 128x128-MXU
    generations (v2..v5), where fusing two 128-wide matmuls into one 256-wide
    pass would double, not halve, the number of MXU passes."""
    try:
        kind = jax.devices()[0].device_kind.lower()
    except Exception:
        return True
    return not any(tag in kind for tag in ("v2", "v3", "v4", "v5"))


# ---------------------------------------------------------------------------
# One-time constant preparation (hoisted out of the per-call hot path)
# ---------------------------------------------------------------------------
def prepare_constants(a_spatial, a_temporal, params, batch_size, fuse_wide=None):
    """Precompute batch-folded / Kronecker-fused constants.

    Call once per (weights, adjacency, batch_size); reuse the result across
    forward calls so the jitted hot path is a single pallas_call plus one
    input relayout and two free output reshapes.
    """
    if fuse_wide is None:
        fuse_wide = _wide_mxu_available()
    B = batch_size
    T = a_temporal.shape[0]
    f32, bf16 = jnp.float32, jnp.bfloat16

    # Spatial adjacency acting on the folded (n-major) sublane axis.
    a_big = jnp.kron(a_spatial.astype(f32), jnp.eye(B, dtype=f32)).astype(bf16)
    # bf16-rounded diagonal so the closed-form Treeinteraction correction is
    # consistent with the bf16 adjacency used on the MXU.
    diag = jnp.repeat(jnp.diagonal(a_spatial).astype(bf16).astype(f32), B)[:, None]

    # Kronecker-fused lane-axis operators:
    #   kron(I_T, W)      -> embedding acting per time block
    #   kron(A_t^T, W)    -> temporal GCN (adjacency + embedding fused)
    eye_t = jnp.eye(T, dtype=f32)
    at_t = a_temporal.T.astype(f32)
    w0k = jnp.kron(eye_t, params["st0_w"])    # (T*F, T*E) Treedeliver embed
    st1m = jnp.kron(at_t, params["st1_w"])    # (T*E, T*E) temporal GCN
    ts0m = jnp.kron(at_t, params["ts0_w"])    # (T*F, T*E) temporal GCN
    w3k = jnp.kron(eye_t, params["ts1_w"])    # (T*E, T*E) Treedeliver embed

    alphas = jnp.concatenate([params["st0_a"], params["st1_a"],
                              params["ts0_a"], params["ts1_a"]]).astype(f32)

    consts = {"a_big": a_big, "diag": diag, "alphas": alphas}
    if fuse_wide:
        def blockdiag(a, b):
            za = jnp.zeros((a.shape[0], b.shape[1]), f32)
            zb = jnp.zeros((b.shape[0], a.shape[1]), f32)
            return jnp.block([[a, za], [zb, b]])
        # One 256-wide MXU pass per stage on v6e/v7x.
        consts["w_stage1"] = blockdiag(w0k, ts0m).astype(bf16)   # (2*T*F, 2*T*E)
        consts["w_stage2"] = blockdiag(st1m, w3k).astype(bf16)   # (2*T*E, 2*T*E)
    else:
        consts["w0k"] = w0k.astype(bf16)
        consts["st1m"] = st1m.astype(bf16)
        consts["ts0m"] = ts0m.astype(bf16)
        consts["w3k"] = w3k.astype(bf16)
    return consts


# ---------------------------------------------------------------------------
# Fused kernel: full SparseGraphConvolution forward in one grid step
# ---------------------------------------------------------------------------
def _make_kernel(tree_path: bool, fuse_wide: bool):
    def tree_stage(a_bf, d, y_f32, y_bf, alpha):
        # Treedeliver_spatial.Treeinteraction, closed form of the per-row
        # replacement loop; degenerates to A @ Y when pednum <= 2.
        h = jnp.dot(a_bf, y_bf, preferred_element_type=jnp.float32)
        if not tree_path:
            return h
        ph = _prelu(h, alpha)
        py = _prelu(y_f32, alpha)
        u = jnp.dot(a_bf, ph.astype(jnp.bfloat16),
                    preferred_element_type=jnp.float32)
        return u + d * (py - ph)          # d = bf16-rounded diag(A_spatial)

    if fuse_wide:
        def kernel(alpha_ref, a_ref, d_ref, x_ref, w1_ref, w2_ref,
                   ost_ref, ots_ref):
            a_st0, a_st1 = alpha_ref[0], alpha_ref[1]
            a_ts0, a_ts1 = alpha_ref[2], alpha_ref[3]
            a_bf = a_ref[...]                     # (M, M) bf16 kron(A_s, I_B)
            d = d_ref[...]                        # (M, 1)  f32
            te = ost_ref.shape[-1]                # T*E (=128 here)
            x = x_ref[...]                        # (M, T*F) f32 folded slab
            x_bf = x.astype(jnp.bfloat16)

            # stage 1: [tree(x) | x] @ blockdiag(kron(I_T,W_st0), kron(A_t^T,W_ts0))
            u = tree_stage(a_bf, d, x, x_bf, a_st0)
            lhs1 = jnp.concatenate([u.astype(jnp.bfloat16), x_bf], axis=-1)
            r1 = jnp.dot(lhs1, w1_ref[...], preferred_element_type=jnp.float32)
            st0 = _prelu(r1[:, :te], a_st0)
            ts0 = _prelu(r1[:, te:], a_ts0)

            # stage 2: [st0 | tree(ts0)] @ blockdiag(kron(A_t^T,W_st1), kron(I_T,W_ts1))
            u2 = tree_stage(a_bf, d, ts0, ts0.astype(jnp.bfloat16), a_ts1)
            lhs2 = jnp.concatenate([st0.astype(jnp.bfloat16),
                                    u2.astype(jnp.bfloat16)], axis=-1)
            r2 = jnp.dot(lhs2, w2_ref[...], preferred_element_type=jnp.float32)
            ost_ref[...] = _prelu(r2[:, :te], a_st1).astype(ost_ref.dtype)
            ots_ref[...] = _prelu(r2[:, te:], a_ts1).astype(ots_ref.dtype)
    else:
        def kernel(alpha_ref, a_ref, d_ref, x_ref,
                   w0k_ref, st1_ref, ts0_ref, w3k_ref, ost_ref, ots_ref):
            a_st0, a_st1 = alpha_ref[0], alpha_ref[1]
            a_ts0, a_ts1 = alpha_ref[2], alpha_ref[3]
            a_bf = a_ref[...]
            d = d_ref[...]
            x = x_ref[...]
            x_bf = x.astype(jnp.bfloat16)

            # spatial -> temporal branch
            u = tree_stage(a_bf, d, x, x_bf, a_st0)
            st0 = _prelu(jnp.dot(u.astype(jnp.bfloat16), w0k_ref[...],
                                 preferred_element_type=jnp.float32), a_st0)
            out_st = _prelu(jnp.dot(st0.astype(jnp.bfloat16), st1_ref[...],
                                    preferred_element_type=jnp.float32), a_st1)
            ost_ref[...] = out_st.astype(ost_ref.dtype)

            # temporal -> spatial branch
            ts0 = _prelu(jnp.dot(x_bf, ts0_ref[...],
                                 preferred_element_type=jnp.float32), a_ts0)
            u2 = tree_stage(a_bf, d, ts0, ts0.astype(jnp.bfloat16), a_ts1)
            out_ts = _prelu(jnp.dot(u2.astype(jnp.bfloat16), w3k_ref[...],
                                    preferred_element_type=jnp.float32), a_ts1)
            ots_ref[...] = out_ts.astype(ots_ref.dtype)

    return kernel


# ---------------------------------------------------------------------------
# Hot path: one relayout + one pallas_call + free reshapes
# ---------------------------------------------------------------------------
@jax.jit
def sparse_graph_convolution(graph, consts):
    B, T, N, Fp1 = graph.shape
    F = Fp1 - 1
    M = N * B
    TF = T * F
    fuse_wide = "w_stage1" in consts
    TE = (consts["w_stage2"].shape[1] // 2) if fuse_wide else consts["w3k"].shape[1]
    E = TE // T

    # Single fused relayout (slice + transpose + reshape) to the batch-folded,
    # n-major, lane-dense slab: X[n*B + b, t*F + f] = graph[b, t, n, 1 + f].
    x = jnp.transpose(graph[..., 1:], (2, 0, 1, 3)).reshape(M, TF)

    kernel = _make_kernel(tree_path=(N > 2), fuse_wide=fuse_wide)

    in_specs = [
        pl.BlockSpec(memory_space=pltpu.MemorySpace.SMEM),   # 4 PReLU alphas
        pl.BlockSpec((M, M), lambda i: (0, 0)),              # kron(A_s, I_B) bf16
        pl.BlockSpec((M, 1), lambda i: (0, 0)),              # its diagonal
        pl.BlockSpec((M, TF), lambda i: (0, 0)),             # folded input slab
    ]
    if fuse_wide:
        in_specs += [pl.BlockSpec((2 * TF, 2 * TE), lambda i: (0, 0)),
                     pl.BlockSpec((2 * TE, 2 * TE), lambda i: (0, 0))]
        weights = (consts["w_stage1"], consts["w_stage2"])
    else:
        in_specs += [pl.BlockSpec((TF, TE), lambda i: (0, 0)),
                     pl.BlockSpec((TE, TE), lambda i: (0, 0)),
                     pl.BlockSpec((TF, TE), lambda i: (0, 0)),
                     pl.BlockSpec((TE, TE), lambda i: (0, 0))]
        weights = (consts["w0k"], consts["st1m"], consts["ts0m"], consts["w3k"])

    out_st, out_ts = pl.pallas_call(
        kernel,
        out_shape=(jax.ShapeDtypeStruct((M, TE), jnp.float32),
                   jax.ShapeDtypeStruct((M, TE), jnp.float32)),
        grid=(1,),                                # whole problem in one step
        in_specs=in_specs,
        out_specs=(pl.BlockSpec((M, TE), lambda i: (0, 0)),
                   pl.BlockSpec((M, TE), lambda i: (0, 0))),
        compiler_params=pltpu.CompilerParams(
            dimension_semantics=("arbitrary",)),
    )(consts["alphas"], consts["a_big"], consts["diag"], x, *weights)

    # n-major row order => the PyTorch (N, B, T, E) layout is a pure reshape,
    # no output transpose kernels.
    return out_st.reshape(N, B, T, E), out_ts.reshape(N, B, T, E)


# ---------------------------------------------------------------------------
# Pure-JAX reference (mirrors the PyTorch loops literally) for validation
# ---------------------------------------------------------------------------
def _ref_gcn(x4, adj, w, alpha):
    h = jnp.matmul(adj, x4)
    return _prelu(jnp.matmul(h, w), alpha)


def _ref_tree(x4, adj, w, alpha):
    n = x4.shape[2]
    if n <= 2:
        return _ref_gcn(x4, adj, w, alpha)
    h = jnp.matmul(adj, x4)
    rows = []
    for i in range(n):
        uh = h.at[:, :, i, :].set(x4[:, :, i, :])
        uh = _prelu(uh, alpha)
        rows.append(jnp.matmul(adj, uh)[:, :, i, :])
    u = jnp.stack(rows, axis=2)
    return _prelu(jnp.matmul(u, w), alpha)


def _ref_forward(graph, a_spatial, a_temporal, params):
    g = graph[:, :, :, 1:]
    spa_graph = jnp.transpose(g, (1, 0, 2, 3))            # (T, B, N, F)
    tem_graph = jnp.transpose(spa_graph, (2, 1, 0, 3))    # (N, B, T, F)

    st0 = _ref_tree(spa_graph, a_spatial, params["st0_w"], params["st0_a"])
    st0 = jnp.transpose(st0, (2, 1, 0, 3))
    out_st = _ref_gcn(st0, a_temporal, params["st1_w"], params["st1_a"])

    ts0 = _ref_gcn(tem_graph, a_temporal, params["ts0_w"], params["ts0_a"])
    ts0 = jnp.transpose(ts0, (2, 1, 0, 3))
    ts1 = _ref_tree(ts0, a_spatial, params["ts1_w"], params["ts1_a"])
    out_ts = jnp.transpose(ts1, (2, 1, 0, 3))
    return out_st, out_ts


if __name__ == "__main__":
    B, T, N, F, E = 2, 8, 5, 16, 16           # graph last dim is F+1, sliced to F
    key = jax.random.PRNGKey(0)
    kg, ks, kt, k0, k1, k2, k3 = jax.random.split(key, 7)

    graph = jax.random.normal(kg, (B, T, N, F + 1), jnp.float32)
    a_spatial = jax.random.normal(ks, (N, N), jnp.float32) * 0.5
    a_temporal = jax.random.normal(kt, (T, T), jnp.float32) * 0.5

    def init_w(k, fan_in, fan_out):
        # deterministic stand-in for nn.Linear's kaiming-uniform init,
        # stored pre-transposed as (fan_in, fan_out) so y = x @ W
        bound = 1.0 / math.sqrt(fan_in)
        return jax.random.uniform(k, (fan_in, fan_out), jnp.float32, -bound, bound)

    alpha = jnp.full((1,), 0.25, jnp.float32)  # PyTorch PReLU default init
    params = {
        "st0_w": init_w(k0, F, E), "st0_a": alpha,   # Treedeliver_spatial(F, E)
        "st1_w": init_w(k1, E, E), "st1_a": alpha,   # GraphConvolution(E, E)
        "ts0_w": init_w(k2, F, E), "ts0_a": alpha,   # GraphConvolution(F, E)
        "ts1_w": init_w(k3, E, E), "ts1_a": alpha,   # Treedeliver_spatial(E, E)
    }

    # One-time preprocessing, hoisted out of the per-call hot path.
    consts = prepare_constants(a_spatial, a_temporal, params, batch_size=B)

    out_st, out_ts = jax.block_until_ready(
        sparse_graph_convolution(graph, consts))
    ref_st, ref_ts = jax.block_until_ready(
        _ref_forward(graph, a_spatial, a_temporal, params))

    assert out_st.shape == (N, B, T, E), out_st.shape
    assert out_ts.shape == (N, B, T, E), out_ts.shape
    # bf16 MXU inputs with f32 accumulation: errors stay well inside 2e-2.
    assert jnp.allclose(out_st, ref_st, rtol=2e-2, atol=2e-2)
    assert jnp.allclose(out_ts, ref_ts, rtol=2e-2, atol=2e-2)
    print("KERNEL_OK")
</pallas_src>

<mosaic_0001>
module attributes {stable_mosaic.version = 11 : i64} {
  func.func @kernel(%arg0: i32, %arg1: memref<4xf32, #tpu.memory_space<smem>>, %arg2: memref<10x10xbf16, #tpu.memory_space<vmem>>, %arg3: memref<10x1xf32, #tpu.memory_space<vmem>>, %arg4: memref<10x128xf32, #tpu.memory_space<vmem>>, %arg5: memref<256x256xbf16, #tpu.memory_space<vmem>>, %arg6: memref<256x256xbf16, #tpu.memory_space<vmem>>, %arg7: memref<10x128xf32, #tpu.memory_space<vmem>>, %arg8: memref<10x128xf32, #tpu.memory_space<vmem>>) attributes {dimension_semantics = [#tpu.dimension_semantics<arbitrary>], iteration_bounds = array<i64: 1>, scalar_prefetch = 0 : i64, scratch_operands = 0 : i64, tpu.core_type = #tpu.core_type<tc>, window_params = [{transform_indices = @transform_0, window_bounds = array<i64: 4>}, {pipeline_mode = #tpu.pipeline_mode<synchronous>, transform_indices = @transform_1, window_bounds = array<i64: 10, 10>}, {pipeline_mode = #tpu.pipeline_mode<synchronous>, transform_indices = @transform_2, window_bounds = array<i64: 10, 1>}, {pipeline_mode = #tpu.pipeline_mode<synchronous>, transform_indices = @transform_3, window_bounds = array<i64: 10, 128>}, {pipeline_mode = #tpu.pipeline_mode<synchronous>, transform_indices = @transform_4, window_bounds = array<i64: 256, 256>}, {pipeline_mode = #tpu.pipeline_mode<synchronous>, transform_indices = @transform_5, window_bounds = array<i64: 256, 256>}, {pipeline_mode = #tpu.pipeline_mode<synchronous>, transform_indices = @transform_6, window_bounds = array<i64: 10, 128>}, {pipeline_mode = #tpu.pipeline_mode<synchronous>, transform_indices = @transform_7, window_bounds = array<i64: 10, 128>}]} {
    %c0 = arith.constant 0 : index
    %0 = memref.load %arg1[%c0] : memref<4xf32, #tpu.memory_space<smem>>
    %c1 = arith.constant 1 : index
    %1 = memref.load %arg1[%c1] : memref<4xf32, #tpu.memory_space<smem>>
    %c2 = arith.constant 2 : index
    %2 = memref.load %arg1[%c2] : memref<4xf32, #tpu.memory_space<smem>>
    %c3 = arith.constant 3 : index
    %3 = memref.load %arg1[%c3] : memref<4xf32, #tpu.memory_space<smem>>
    %c0_0 = arith.constant 0 : index
    %c0_1 = arith.constant 0 : index
    %4 = vector.load %arg2[%c0_0, %c0_1] : memref<10x10xbf16, #tpu.memory_space<vmem>>, vector<10x10xbf16>
    %c0_2 = arith.constant 0 : index
    %c0_3 = arith.constant 0 : index
    %5 = vector.load %arg3[%c0_2, %c0_3] : memref<10x1xf32, #tpu.memory_space<vmem>>, vector<10x1xf32>
    %c0_4 = arith.constant 0 : index
    %c0_5 = arith.constant 0 : index
    %6 = vector.load %arg4[%c0_4, %c0_5] : memref<10x128xf32, #tpu.memory_space<vmem>>, vector<10x128xf32>
    %7 = arith.truncf %6 : vector<10x128xf32> to vector<10x128xbf16>
    %cst = arith.constant dense<0.000000e+00> : vector<10x128xf32>
    %8 = tpu.matmul %4, %7, %cst {dimension_numbers = #tpu.dot_dimension_numbers<[1], [0], [0], [1], [0, 0, 1, 1], [], []>} : vector<10x10xbf16>, vector<10x128xbf16>, vector<10x128xf32> -> vector<10x128xf32>
    %cst_6 = arith.constant 0.000000e+00 : f32
    %9 = vector.broadcast %cst_6 : f32 to vector<10x128xf32>
    %10 = arith.cmpf oge, %8, %9 : vector<10x128xf32>
    %11 = vector.broadcast %0 : f32 to vector<10x128xf32>
    %12 = arith.mulf %11, %8 : vector<10x128xf32>
    %13 = arith.select %10, %8, %12 : vector<10x128xi1>, vector<10x128xf32>
    %cst_7 = arith.constant 0.000000e+00 : f32
    %14 = vector.broadcast %cst_7 : f32 to vector<10x128xf32>
    %15 = arith.cmpf oge, %6, %14 : vector<10x128xf32>
    %16 = vector.broadcast %0 : f32 to vector<10x128xf32>
    %17 = arith.mulf %16, %6 : vector<10x128xf32>
    %18 = arith.select %15, %6, %17 : vector<10x128xi1>, vector<10x128xf32>
    %19 = arith.truncf %13 : vector<10x128xf32> to vector<10x128xbf16>
    %cst_8 = arith.constant dense<0.000000e+00> : vector<10x128xf32>
    %20 = tpu.matmul %4, %19, %cst_8 {dimension_numbers = #tpu.dot_dimension_numbers<[1], [0], [0], [1], [0, 0, 1, 1], [], []>} : vector<10x10xbf16>, vector<10x128xbf16>, vector<10x128xf32> -> vector<10x128xf32>
    %21 = arith.subf %18, %13 : vector<10x128xf32>
    %22 = vector.broadcast %5 : vector<10x1xf32> to vector<10x128xf32>
    %23 = arith.mulf %22, %21 : vector<10x128xf32>
    %24 = arith.addf %20, %23 : vector<10x128xf32>
    %25 = arith.truncf %24 : vector<10x128xf32> to vector<10x128xbf16>
    %26 = tpu.concatenate %25, %7 in 1 : vector<10x128xbf16>, vector<10x128xbf16> -> vector<10x256xbf16>
    %c0_9 = arith.constant 0 : index
    %c0_10 = arith.constant 0 : index
    %27 = vector.load %arg5[%c0_9, %c0_10] : memref<256x256xbf16, #tpu.memory_space<vmem>>, vector<256x256xbf16>
    %cst_11 = arith.constant dense<0.000000e+00> : vector<10x256xf32>
    %28 = tpu.matmul %26, %27, %cst_11 {dimension_numbers = #tpu.dot_dimension_numbers<[1], [0], [0], [1], [0, 0, 1, 1], [], []>} : vector<10x256xbf16>, vector<256x256xbf16>, vector<10x256xf32> -> vector<10x256xf32>
    %29 = vector.extract_strided_slice %28 {offsets = [0, 0], sizes = [10, 128], strides = [1, 1]} : vector<10x256xf32> to vector<10x128xf32>
    %cst_12 = arith.constant 0.000000e+00 : f32
    %30 = vector.broadcast %cst_12 : f32 to vector<10x128xf32>
    %31 = arith.cmpf oge, %29, %30 : vector<10x128xf32>
    %32 = vector.broadcast %0 : f32 to vector<10x128xf32>
    %33 = arith.mulf %32, %29 : vector<10x128xf32>
    %34 = arith.select %31, %29, %33 : vector<10x128xi1>, vector<10x128xf32>
    %35 = vector.extract_strided_slice %28 {offsets = [0, 128], sizes = [10, 128], strides = [1, 1]} : vector<10x256xf32> to vector<10x128xf32>
    %cst_13 = arith.constant 0.000000e+00 : f32
    %36 = vector.broadcast %cst_13 : f32 to vector<10x128xf32>
    %37 = arith.cmpf oge, %35, %36 : vector<10x128xf32>
    %38 = vector.broadcast %2 : f32 to vector<10x128xf32>
    %39 = arith.mulf %38, %35 : vector<10x128xf32>
    %40 = arith.select %37, %35, %39 : vector<10x128xi1>, vector<10x128xf32>
    %41 = arith.truncf %40 : vector<10x128xf32> to vector<10x128xbf16>
    %cst_14 = arith.constant dense<0.000000e+00> : vector<10x128xf32>
    %42 = tpu.matmul %4, %41, %cst_14 {dimension_numbers = #tpu.dot_dimension_numbers<[1], [0], [0], [1], [0, 0, 1, 1], [], []>} : vector<10x10xbf16>, vector<10x128xbf16>, vector<10x128xf32> -> vector<10x128xf32>
    %cst_15 = arith.constant 0.000000e+00 : f32
    %43 = vector.broadcast %cst_15 : f32 to vector<10x128xf32>
    %44 = arith.cmpf oge, %42, %43 : vector<10x128xf32>
    %45 = vector.broadcast %3 : f32 to vector<10x128xf32>
    %46 = arith.mulf %45, %42 : vector<10x128xf32>
    %47 = arith.select %44, %42, %46 : vector<10x128xi1>, vector<10x128xf32>
    %cst_16 = arith.constant 0.000000e+00 : f32
    %48 = vector.broadcast %cst_16 : f32 to vector<10x128xf32>
    %49 = arith.cmpf oge, %40, %48 : vector<10x128xf32>
    %50 = vector.broadcast %3 : f32 to vector<10x128xf32>
    %51 = arith.mulf %50, %40 : vector<10x128xf32>
    %52 = arith.select %49, %40, %51 : vector<10x128xi1>, vector<10x128xf32>
    %53 = arith.truncf %47 : vector<10x128xf32> to vector<10x128xbf16>
    %cst_17 = arith.constant dense<0.000000e+00> : vector<10x128xf32>
    %54 = tpu.matmul %4, %53, %cst_17 {dimension_numbers = #tpu.dot_dimension_numbers<[1], [0], [0], [1], [0, 0, 1, 1], [], []>} : vector<10x10xbf16>, vector<10x128xbf16>, vector<10x128xf32> -> vector<10x128xf32>
    %55 = arith.subf %52, %47 : vector<10x128xf32>
    %56 = vector.broadcast %5 : vector<10x1xf32> to vector<10x128xf32>
    %57 = arith.mulf %56, %55 : vector<10x128xf32>
    %58 = arith.addf %54, %57 : vector<10x128xf32>
    %59 = arith.truncf %34 : vector<10x128xf32> to vector<10x128xbf16>
    %60 = arith.truncf %58 : vector<10x128xf32> to vector<10x128xbf16>
    %61 = tpu.concatenate %59, %60 in 1 : vector<10x128xbf16>, vector<10x128xbf16> -> vector<10x256xbf16>
    %c0_18 = arith.constant 0 : index
    %c0_19 = arith.constant 0 : index
    %62 = vector.load %arg6[%c0_18, %c0_19] : memref<256x256xbf16, #tpu.memory_space<vmem>>, vector<256x256xbf16>
    %cst_20 = arith.constant dense<0.000000e+00> : vector<10x256xf32>
    %63 = tpu.matmul %61, %62, %cst_20 {dimension_numbers = #tpu.dot_dimension_numbers<[1], [0], [0], [1], [0, 0, 1, 1], [], []>} : vector<10x256xbf16>, vector<256x256xbf16>, vector<10x256xf32> -> vector<10x256xf32>
    %64 = vector.extract_strided_slice %63 {offsets = [0, 0], sizes = [10, 128], strides = [1, 1]} : vector<10x256xf32> to vector<10x128xf32>
    %cst_21 = arith.constant 0.000000e+00 : f32
    %65 = vector.broadcast %cst_21 : f32 to vector<10x128xf32>
    %66 = arith.cmpf oge, %64, %65 : vector<10x128xf32>
    %67 = vector.broadcast %1 : f32 to vector<10x128xf32>
    %68 = arith.mulf %67, %64 : vector<10x128xf32>
    %69 = arith.select %66, %64, %68 : vector<10x128xi1>, vector<10x128xf32>
    %c0_22 = arith.constant 0 : index
    %c0_23 = arith.constant 0 : index
    %70 = vector.load %arg7[%c0_22, %c0_23] : memref<10x128xf32, #tpu.memory_space<vmem>>, vector<10x128xf32>
    tpu.vector_store %arg7[%c0_22, %c0_23], %69 {strides = array<i32>} : memref<10x128xf32, #tpu.memory_space<vmem>>, vector<10x128xf32>,
    %71 = vector.extract_strided_slice %63 {offsets = [0, 128], sizes = [10, 128], strides = [1, 1]} : vector<10x256xf32> to vector<10x128xf32>
    %cst_24 = arith.constant 0.000000e+00 : f32
    %72 = vector.broadcast %cst_24 : f32 to vector<10x128xf32>
    %73 = arith.cmpf oge, %71, %72 : vector<10x128xf32>
    %74 = vector.broadcast %3 : f32 to vector<10x128xf32>
    %75 = arith.mulf %74, %71 : vector<10x128xf32>
    %76 = arith.select %73, %71, %75 : vector<10x128xi1>, vector<10x128xf32>
    %c0_25 = arith.constant 0 : index
    %c0_26 = arith.constant 0 : index
    %77 = vector.load %arg8[%c0_25, %c0_26] : memref<10x128xf32, #tpu.memory_space<vmem>>, vector<10x128xf32>
    tpu.vector_store %arg8[%c0_25, %c0_26], %76 {strides = array<i32>} : memref<10x128xf32, #tpu.memory_space<vmem>>, vector<10x128xf32>,
    return
  }
  func.func @transform_0(%arg0: i32) -> i32 {
    %c0_i32 = arith.constant 0 : i32
    %c0_i32_0 = arith.constant 0 : i32
    return %c0_i32 : i32
  }
  func.func @transform_1(%arg0: i32) -> (i32, i32) {
    %c0_i32 = arith.constant 0 : i32
    %c0_i32_0 = arith.constant 0 : i32
    %c0_i32_1 = arith.constant 0 : i32
    return %c0_i32, %c0_i32_0 : i32, i32
  }
  func.func @transform_2(%arg0: i32) -> (i32, i32) {
    %c0_i32 = arith.constant 0 : i32
    %c0_i32_0 = arith.constant 0 : i32
    %c0_i32_1 = arith.constant 0 : i32
    return %c0_i32, %c0_i32_0 : i32, i32
  }
  func.func @transform_3(%arg0: i32) -> (i32, i32) {
    %c0_i32 = arith.constant 0 : i32
    %c0_i32_0 = arith.constant 0 : i32
    %c0_i32_1 = arith.constant 0 : i32
    return %c0_i32, %c0_i32_0 : i32, i32
  }
  func.func @transform_4(%arg0: i32) -> (i32, i32) {
    %c0_i32 = arith.constant 0 : i32
    %c0_i32_0 = arith.constant 0 : i32
    %c0_i32_1 = arith.constant 0 : i32
    return %c0_i32, %c0_i32_0 : i32, i32
  }
  func.func @transform_5(%arg0: i32) -> (i32, i32) {
    %c0_i32 = arith.constant 0 : i32
    %c0_i32_0 = arith.constant 0 : i32
    %c0_i32_1 = arith.constant 0 : i32
    return %c0_i32, %c0_i32_0 : i32, i32
  }
  func.func @transform_6(%arg0: i32) -> (i32, i32) {
    %c0_i32 = arith.constant 0 : i32
    %c0_i32_0 = arith.constant 0 : i32
    %c0_i32_1 = arith.constant 0 : i32
    return %c0_i32, %c0_i32_0 : i32, i32
  }
  func.func @transform_7(%arg0: i32) -> (i32, i32) {
    %c0_i32 = arith.constant 0 : i32
    %c0_i32_0 = arith.constant 0 : i32
    %c0_i32_1 = arith.constant 0 : i32
    return %c0_i32, %c0_i32_0 : i32, i32
  }
}

</mosaic_0001>

<llo_original>
// kernel: sparse_graph_convolution.1
$region0: #{sparse_graph_convolution.1}
  #allocation0 [shape = 'u32[]', space=smem, size = 0x4, offset = 0x4, fixed_abs, tag = 'smem constant byte address 0x4 - core index']
  #allocation1 [shape = 'u32[144,128]{1,0:T(1,128)}', space=vmem, size = 0x12000, scoped, tag = 'internal scratch']
  %s0 = inlined_call_operand.vmem [shape: f32[4], index: 0, kind: input, shape index: {}]
  %s1 = inlined_call_operand.vmem [shape: bf16[10,10], index: 1, kind: input, shape index: {}]
  %s2 = inlined_call_operand.vmem [shape: f32[10,1], index: 2, kind: input, shape index: {}]
  %s3 = inlined_call_operand.vmem [shape: f32[10,128], index: 3, kind: input, shape index: {}]
  %s4 = inlined_call_operand.vmem [shape: bf16[256,256], index: 4, kind: input, shape index: {}]
  %s5 = inlined_call_operand.hbm [shape: bf16[256,256], index: 5, kind: input, shape index: {}]
  %s6 = inlined_call_operand.vmem [shape: f32[10,128], index: 6, kind: output, shape index: {0}]
  %s7 = inlined_call_operand.vmem [shape: f32[10,128], index: 7, kind: output, shape index: {1}]
  %8 = xla_tuple %s6, %s7
  %s9 = sld [smem:[#allocation0]]
  $region50: #{sparse_graph_convolution.1} parent=0
    _
  %s11 = ssub.s32 1, %s9
  %s12 = scalar_select 0, %s11, %s9
  $region1: #{sparse_graph_convolution.1} parent=0
    #allocation2 [shape = 'u8[512]{0}', space=smem, size = 0x200, scoped, tag = 'input window, operand 0, single buffered']
    #allocation3 [shape = 's32[1]{0}', space=sflag, size = 0x4, scoped, tag = 'scoped memory for sparse_graph_convolution.1']
    #allocation4 [shape = 's32[1]{0}', space=sflag, size = 0x4, scoped, tag = 'scoped memory for sparse_graph_convolution.1']
    #allocation5 [shape = 'u8[131072]{0}', space=vmem, size = 0x20000, scoped, tag = 'input window, operand 5, single buffered']
    %13 = vsyncpa [#allocation4], 0
    %14 = vsyncpa [#allocation3], 0
    // Predicated region
    $region2: #{sparse_graph_convolution.1} parent=1 // pred_check
      _
    $region3: #{sparse_graph_convolution.1} parent=1 // pred_check_branch
      %16 = sbr.rel (0) target = $region5
    $region4: #{sparse_graph_convolution.1} parent=1 // pred_region
      %s18 = ssub.s32 16, 16
      %19 = vsyncadd [#allocation4], %s18
      %s21 = sshll.u32 %s0, 4
      %s22 = int_to_ptr.vmem [resolvable:$true] %s21
      %24 = dma.vmem_to_smem %s22, 16, [#allocation2], [#allocation4]
    $region5: #{sparse_graph_convolution.1} parent=1 // pred_fallthru
      _
    // Predicated region
    $region6: #{sparse_graph_convolution.1} parent=1 // pred_check
      _
    $region7: #{sparse_graph_convolution.1} parent=1 // pred_check_branch
      %26 = sbr.rel (0) target = $region9
    $region8: #{sparse_graph_convolution.1} parent=1 // pred_region
      _
    $region9: #{sparse_graph_convolution.1} parent=1 // pred_fallthru
      _
    // Predicated region
    $region10: #{sparse_graph_convolution.1} parent=1 // pred_check
      _
    $region11: #{sparse_graph_convolution.1} parent=1 // pred_check_branch
      %28 = sbr.rel (0) target = $region13
    $region12: #{sparse_graph_convolution.1} parent=1 // pred_region
      _
    $region13: #{sparse_graph_convolution.1} parent=1 // pred_fallthru
      _
    // Predicated region
    $region14: #{sparse_graph_convolution.1} parent=1 // pred_check
      _
    $region15: #{sparse_graph_convolution.1} parent=1 // pred_check_branch
      %30 = sbr.rel (0) target = $region17
    $region16: #{sparse_graph_convolution.1} parent=1 // pred_region
      _
    $region17: #{sparse_graph_convolution.1} parent=1 // pred_fallthru
      _
    // Predicated region
    $region18: #{sparse_graph_convolution.1} parent=1 // pred_check
      _
    $region19: #{sparse_graph_convolution.1} parent=1 // pred_check_branch
      %32 = sbr.rel (0) target = $region21
    $region20: #{sparse_graph_convolution.1} parent=1 // pred_region
      _
    $region21: #{sparse_graph_convolution.1} parent=1 // pred_fallthru
      _
    // Predicated region
    $region22: #{sparse_graph_convolution.1} parent=1 // pred_check
      _
    $region23: #{sparse_graph_convolution.1} parent=1 // pred_check_branch
      %34 = sbr.rel (0) target = $region25
    $region24: #{sparse_graph_convolution.1} parent=1 // pred_region
      %s36 = ssub.s32 4096, 4096
      %37 = vsyncadd [#allocation3], %s36
      %s38 = sshll.u32 [#allocation5], 4
      %s39 = int_to_ptr.vmem [resolvable:$true] %s38
      %44 = dma.hbm_to_vmem [thread:$0]  %s5, 4096, %s39, [#allocation3], 128, 128, 8
    $region25: #{sparse_graph_convolution.1} parent=1 // pred_fallthru
      _
    // Predicated region
    $region26: #{sparse_graph_convolution.1} parent=1 // pred_check
      _
    $region27: #{sparse_graph_convolution.1} parent=1 // pred_check_branch
      %46 = sbr.rel (0) target = $region29
    $region28: #{sparse_graph_convolution.1} parent=1 // pred_region
      %47 = dma.done [#allocation4], 16
    $region29: #{sparse_graph_convolution.1} parent=1 // pred_fallthru
      _
    // Predicated region
    $region30: #{sparse_graph_convolution.1} parent=1 // pred_check
      _
    $region31: #{sparse_graph_convolution.1} parent=1 // pred_check_branch
      %49 = sbr.rel (0) target = $region33
    $region32: #{sparse_graph_convolution.1} parent=1 // pred_region
      %50 = dma.done [#allocation3], 4096
    $region33: #{sparse_graph_convolution.1} parent=1 // pred_fallthru
      _
    %51 = sfence
    %s53 = sld [smem:[#allocation2]]
    %s54 = sld [smem:[#allocation2 + $0x1]]
    %s55 = sld [smem:[#allocation2 + $0x2]]
    %s56 = sld [smem:[#allocation2 + $0x3]]
    %v57 = vld [vmem:[%s1] sm:$0xf]
    %v58 = vld [vmem:[%s1 + $0x4] sm:$0x1]
    %v59 = vld [vmem:[%s2] sm:$0xff]
    %v60 = vld [vmem:[%s2 + $0x8] sm:$0x3]
    %v61 = vld [vmem:[%s3] sm:$0xff]
    %v62 = vld [vmem:[%s3 + $0x8] sm:$0x3]
    %v63 = vpack.c.bf16 %v62, %v61
    %v66 = vunpack.c.l.b16 %v57
    %v67 = vunpack.c.l.b16 %v58
    %v68 = vpack.c.b16 %v67, %v66
    %vm69 = vcmask 80896
    %v71 = vsel %vm69, %v68, 0
    %vm73 = vcmask 1044480
    %v75 = vsel %vm73, %v63, 0
    %77 = vmatprep.subr.bf16.mxu0 0
    %78 = vmatpush1.bf16.msra.mxu0 0
    %79 = vmatprep.subr.bf16.mxu0 0
    %80 = vmatpush1.bf16.msra.mxu0 0
    %81 = vmatprep.subr.bf16.mxu0 0
    %82 = vmatpush1.bf16.msra.mxu0 0
    %83 = vmatprep.subr.bf16.mxu0 0
    %84 = vmatpush1.bf16.msra.mxu0 0
    %85 = vmatprep.subr.bf16.mxu0 0
    %86 = vmatpush1.bf16.msra.mxu0 0
    %87 = vmatprep.subr.bf16.mxu0 0
    %88 = vmatpush1.bf16.msra.mxu0 0
    %89 = vmatprep.subr.bf16.mxu0 0
    %90 = vmatpush1.bf16.msra.mxu0 0
    %91 = vmatprep.subr.bf16.mxu0 0
    %92 = vmatpush1.bf16.msra.mxu0 %v75
    %93 = vmatprep.subr.bf16.mxu0 0
    %94 = vmatpush2.bf16.msra.mxu0 0
    %95 = vmatprep.subr.bf16.mxu0 0
    %96 = vmatpush2.bf16.msra.mxu0 0
    %97 = vmatprep.subr.bf16.mxu0 0
    %98 = vmatpush2.bf16.msra.mxu0 0
    %99 = vmatprep.subr.bf16.mxu0 0
    %100 = vmatpush2.bf16.msra.mxu0 0
    %101 = vmatprep.subr.bf16.mxu0 0
    %102 = vmatpush2.bf16.msra.mxu0 0
    %103 = vmatprep.subr.bf16.mxu0 0
    %104 = vmatpush2.bf16.msra.mxu0 0
    %105 = vmatprep.subr.bf16.mxu0 0
    %106 = vmatpush2.bf16.msra.mxu0 0
    %107 = vmatprep.subr.bf16.mxu0 0
    %108 = vmatpush2.bf16.msra.mxu0 0
    %109 = vmatprep.mubr.bf16.mxu0 0
    %110 = vmatmul.mubr.bf16.gmra.mxu0 %v71
    %v111 = vpop.f32.mrf.mxu0
    %v112 = vadd.f32 0.0, %v111
    %v113 = vpop.f32.mrf.mxu0
    %v114 = vpop.f32.mrf.mxu0
    %v115 = vadd.f32 0.0, %v114
    %v116 = vpop.f32.mrf.mxu0
    %117 = vdwg.mxu0
    %vm118 = vcmp.ge.f32.partialorder %v112, 0.0
    %vm119 = vcmp.ge.f32.partialorder %v115, 0.0
    %v120 = vstv %s53
    %v121 = vmul.f32 %v120, %v112
    %v122 = vmul.f32 %v120, %v115
    %v123 = vsel %vm118, %v112, %v121
    %v124 = vsel %vm119, %v115, %v122
    %vm125 = vcmp.ge.f32.partialorder %v61, 0.0
    %vm126 = vcmp.ge.f32.partialorder %v62, 0.0
    %v127 = vmul.f32 %v120, %v61
    %v128 = vmul.f32 %v120, %v62
    %v129 = vsel %vm125, %v61, %v127
    %v130 = vsel %vm126, %v62, %v128
    %v131 = vpack.c.bf16 %v124, %v123
    %v132 = vsub.f32 %v129, %v123
    %v133 = vsub.f32 %v130, %v124
    %135 = vset.pattern.permute.xlu0 0
    %136 = vperm.xlu0 %135, %v59
    %v137 = vpop.permute.xlu0 %136
    %140 = vset.pattern.permute.xlu0 0
    %141 = vperm.xlu0 %140, %v60
    %v142 = vpop.permute.xlu0 %141
    %v144 = vmul.f32 %v137, %v132
    %v145 = vmul.f32 %v142, %v133
    %v147 = vsel %vm73, %v131, 0
    %149 = vmatprep.subr.bf16.mxu0 0
    %150 = vmatpush1.bf16.msra.mxu0 0
    %151 = vmatprep.subr.bf16.mxu0 0
    %152 = vmatpush1.bf16.msra.mxu0 0
    %153 = vmatprep.subr.bf16.mxu0 0
    %154 = vmatpush1.bf16.msra.mxu0 0
    %155 = vmatprep.subr.bf16.mxu0 0
    %156 = vmatpush1.bf16.msra.mxu0 0
    %157 = vmatprep.subr.bf16.mxu0 0
    %158 = vmatpush1.bf16.msra.mxu0 0
    %159 = vmatprep.subr.bf16.mxu0 0
    %160 = vmatpush1.bf16.msra.mxu0 0
    %161 = vmatprep.subr.bf16.mxu0 0
    %162 = vmatpush1.bf16.msra.mxu0 0
    %163 = vmatprep.subr.bf16.mxu0 0
    %164 = vmatpush1.bf16.msra.mxu0 %v147
    %165 = vmatprep.subr.bf16.mxu0 0
    %166 = vmatpush2.bf16.msra.mxu0 0
    %167 = vmatprep.subr.bf16.mxu0 0
    %168 = vmatpush2.bf16.msra.mxu0 0
    %169 = vmatprep.subr.bf16.mxu0 0
    %170 = vmatpush2.bf16.msra.mxu0 0
    %171 = vmatprep.subr.bf16.mxu0 0
    %172 = vmatpush2.bf16.msra.mxu0 0
    %173 = vmatprep.subr.bf16.mxu0 0
    %174 = vmatpush2.bf16.msra.mxu0 0
    %175 = vmatprep.subr.bf16.mxu0 0
    %176 = vmatpush2.bf16.msra.mxu0 0
    %177 = vmatprep.subr.bf16.mxu0 0
    %178 = vmatpush2.bf16.msra.mxu0 0
    %179 = vmatprep.subr.bf16.mxu0 0
    %180 = vmatpush2.bf16.msra.mxu0 0
    %181 = vmatprep.mubr.bf16.mxu0 0
    %182 = vmatmul.mubr.bf16.gmra.mxu0 %v71
    %v183 = vpop.f32.mrf.mxu0
    %v184 = vadd.f32 %v144, %v183
    %v185 = vpop.f32.mrf.mxu0
    %v186 = vpop.f32.mrf.mxu0
    %v187 = vadd.f32 %v145, %v186
    %v188 = vpop.f32.mrf.mxu0
    %189 = vdwg.mxu0
    %v190 = vpack.c.bf16 %v187, %v184
    %v191 = vld [vmem:[%s4] sm:$0xff]
    %v192 = vld [vmem:[%s4 + $0x8] sm:$0xff]
    %v193 = vld [vmem:[%s4 + $0x10] sm:$0xff]
    %v194 = vld [vmem:[%s4 + $0x18] sm:$0xff]
    %v195 = vld [vmem:[%s4 + $0x20] sm:$0xff]
    %v196 = vld [vmem:[%s4 + $0x28] sm:$0xff]
    %v197 = vld [vmem:[%s4 + $0x30] sm:$0xff]
    %v198 = vld [vmem:[%s4 + $0x38] sm:$0xff]
    %v199 = vld [vmem:[%s4 + $0x40] sm:$0xff]
    %v200 = vld [vmem:[%s4 + $0x48] sm:$0xff]
    %v201 = vld [vmem:[%s4 + $0x50] sm:$0xff]
    %v202 = vld [vmem:[%s4 + $0x58] sm:$0xff]
    %v203 = vld [vmem:[%s4 + $0x60] sm:$0xff]
    %v204 = vld [vmem:[%s4 + $0x68] sm:$0xff]
    %v205 = vld [vmem:[%s4 + $0x70] sm:$0xff]
    %v206 = vld [vmem:[%s4 + $0x78] sm:$0xff]
    %v207 = vld [vmem:[%s4 + $0x80] sm:$0xff]
    %v208 = vld [vmem:[%s4 + $0x88] sm:$0xff]
    %v209 = vld [vmem:[%s4 + $0x90] sm:$0xff]
    %v210 = vld [vmem:[%s4 + $0x98] sm:$0xff]
    %v211 = vld [vmem:[%s4 + $0xa0] sm:$0xff]
    %v212 = vld [vmem:[%s4 + $0xa8] sm:$0xff]
    %v213 = vld [vmem:[%s4 + $0xb0] sm:$0xff]
    %v214 = vld [vmem:[%s4 + $0xb8] sm:$0xff]
    %v215 = vld [vmem:[%s4 + $0xc0] sm:$0xff]
    %v216 = vld [vmem:[%s4 + $0xc8] sm:$0xff]
    %v217 = vld [vmem:[%s4 + $0xd0] sm:$0xff]
    %v218 = vld [vmem:[%s4 + $0xd8] sm:$0xff]
    %v219 = vld [vmem:[%s4 + $0xe0] sm:$0xff]
    %v220 = vld [vmem:[%s4 + $0xe8] sm:$0xff]
    %v221 = vld [vmem:[%s4 + $0xf0] sm:$0xff]
    %v222 = vld [vmem:[%s4 + $0xf8] sm:$0xff]
    %v255 = vunpack.c.l.b16 %v191
    %v256 = vunpack.c.h.b16 %v191
    %v257 = vunpack.c.l.b16 %v192
    %v258 = vunpack.c.h.b16 %v192
    %v259 = vunpack.c.l.b16 %v193
    %v260 = vunpack.c.h.b16 %v193
    %v261 = vunpack.c.l.b16 %v194
    %v262 = vunpack.c.h.b16 %v194
    %v263 = vunpack.c.l.b16 %v195
    %v264 = vunpack.c.h.b16 %v195
    %v265 = vunpack.c.l.b16 %v196
    %v266 = vunpack.c.h.b16 %v196
    %v267 = vunpack.c.l.b16 %v197
    %v268 = vunpack.c.h.b16 %v197
    %v269 = vunpack.c.l.b16 %v198
    %v270 = vunpack.c.h.b16 %v198
    %v271 = vunpack.c.l.b16 %v199
    %v272 = vunpack.c.h.b16 %v199
    %v273 = vunpack.c.l.b16 %v200
    %v274 = vunpack.c.h.b16 %v200
    %v275 = vunpack.c.l.b16 %v201
    %v276 = vunpack.c.h.b16 %v201
    %v277 = vunpack.c.l.b16 %v202
    %v278 = vunpack.c.h.b16 %v202
    %v279 = vunpack.c.l.b16 %v203
    %v280 = vunpack.c.h.b16 %v203
    %v281 = vunpack.c.l.b16 %v204
    %v282 = vunpack.c.h.b16 %v204
    %v283 = vunpack.c.l.b16 %v205
    %v284 = vunpack.c.h.b16 %v205
    %v285 = vunpack.c.l.b16 %v206
    %v286 = vunpack.c.h.b16 %v206
    %v287 = vunpack.c.l.b16 %v207
    %v288 = vunpack.c.h.b16 %v207
    %v289 = vunpack.c.l.b16 %v208
    %v290 = vunpack.c.h.b16 %v208
    %v291 = vunpack.c.l.b16 %v209
    %v292 = vunpack.c.h.b16 %v209
    %v293 = vunpack.c.l.b16 %v210
    %v294 = vunpack.c.h.b16 %v210
    %v295 = vunpack.c.l.b16 %v211
    %v296 = vunpack.c.h.b16 %v211
    %v297 = vunpack.c.l.b16 %v212
    %v298 = vunpack.c.h.b16 %v212
    %v299 = vunpack.c.l.b16 %v213
    %v300 = vunpack.c.h.b16 %v213
    %v301 = vunpack.c.l.b16 %v214
    %v302 = vunpack.c.h.b16 %v214
    %v303 = vunpack.c.l.b16 %v215
    %v304 = vunpack.c.h.b16 %v215
    %v305 = vunpack.c.l.b16 %v216
    %v306 = vunpack.c.h.b16 %v216
    %v307 = vunpack.c.l.b16 %v217
    %v308 = vunpack.c.h.b16 %v217
    %v309 = vunpack.c.l.b16 %v218
    %v310 = vunpack.c.h.b16 %v218
    %v311 = vunpack.c.l.b16 %v219
    %v312 = vunpack.c.h.b16 %v219
    %v313 = vunpack.c.l.b16 %v220
    %v314 = vunpack.c.h.b16 %v220
    %v315 = vunpack.c.l.b16 %v221
    %v316 = vunpack.c.h.b16 %v221
    %v317 = vunpack.c.l.b16 %v222
    %v318 = vunpack.c.h.b16 %v222
    %v319 = vpack.c.b16 %v257, %v255
    %v320 = vpack.c.b16 %v258, %v256
    %v321 = vpack.c.b16 %v261, %v259
    %v322 = vpack.c.b16 %v262, %v260
    %v323 = vpack.c.b16 %v265, %v263
    %v324 = vpack.c.b16 %v266, %v264
    %v325 = vpack.c.b16 %v269, %v267
    %v326 = vpack.c.b16 %v270, %v268
    %v327 = vpack.c.b16 %v273, %v271
    %v328 = vpack.c.b16 %v274, %v272
    %v329 = vpack.c.b16 %v277, %v275
    %v330 = vpack.c.b16 %v278, %v276
    %v331 = vpack.c.b16 %v281, %v279
    %v332 = vpack.c.b16 %v282, %v280
    %v333 = vpack.c.b16 %v285, %v283
    %v334 = vpack.c.b16 %v286, %v284
    %v335 = vpack.c.b16 %v289, %v287
    %v336 = vpack.c.b16 %v290, %v288
    %v337 = vpack.c.b16 %v293, %v291
    %v338 = vpack.c.b16 %v294, %v292
    %v339 = vpack.c.b16 %v297, %v295
    %v340 = vpack.c.b16 %v298, %v296
    %v341 = vpack.c.b16 %v301, %v299
    %v342 = vpack.c.b16 %v302, %v300
    %v343 = vpack.c.b16 %v305, %v303
    %v344 = vpack.c.b16 %v306, %v304
    %v345 = vpack.c.b16 %v309, %v307
    %v346 = vpack.c.b16 %v310, %v308
    %v347 = vpack.c.b16 %v313, %v311
    %v348 = vpack.c.b16 %v314, %v312
    %v349 = vpack.c.b16 %v317, %v315
    %v350 = vpack.c.b16 %v318, %v316
    %383 = vmatprep.subr.bf16.mxu0 %v334
    %384 = vmatpush1.bf16.msra.mxu0 %v333
    %385 = vmatprep.subr.bf16.mxu0 %v332
    %386 = vmatpush1.bf16.msra.mxu0 %v331
    %387 = vmatprep.subr.bf16.mxu0 %v330
    %388 = vmatpush1.bf16.msra.mxu0 %v329
    %389 = vmatprep.subr.bf16.mxu0 %v328
    %390 = vmatpush1.bf16.msra.mxu0 %v327
    %391 = vmatprep.subr.bf16.mxu0 %v326
    %392 = vmatpush1.bf16.msra.mxu0 %v325
    %393 = vmatprep.subr.bf16.mxu0 %v324
    %394 = vmatpush1.bf16.msra.mxu0 %v323
    %395 = vmatprep.subr.bf16.mxu0 %v322
    %396 = vmatpush1.bf16.msra.mxu0 %v321
    %397 = vmatprep.subr.bf16.mxu0 %v320
    %398 = vmatpush1.bf16.msra.mxu0 %v319
    %399 = vmatprep.subr.bf16.mxu0 %v350
    %400 = vmatpush2.bf16.msra.mxu0 %v349
    %401 = vmatprep.subr.bf16.mxu0 %v348
    %402 = vmatpush2.bf16.msra.mxu0 %v347
    %403 = vmatprep.subr.bf16.mxu0 %v346
    %404 = vmatpush2.bf16.msra.mxu0 %v345
    %405 = vmatprep.subr.bf16.mxu0 %v344
    %406 = vmatpush2.bf16.msra.mxu0 %v343
    %407 = vmatprep.subr.bf16.mxu0 %v342
    %408 = vmatpush2.bf16.msra.mxu0 %v341
    %409 = vmatprep.subr.bf16.mxu0 %v340
    %410 = vmatpush2.bf16.msra.mxu0 %v339
    %411 = vmatprep.subr.bf16.mxu0 %v338
    %412 = vmatpush2.bf16.msra.mxu0 %v337
    %413 = vmatprep.subr.bf16.mxu0 %v336
    %414 = vmatpush2.bf16.msra.mxu0 %v335
    %415 = vmatprep.mubr.bf16.mxu0 %v63
    %416 = vmatmul.mubr.bf16.gmra.mxu0 %v190
    %v417 = vpop.f32.mrf.mxu0
    %v418 = vadd.f32 0.0, %v417
    %v419 = vpop.f32.mrf.mxu0
    %v420 = vadd.f32 0.0, %v419
    %v421 = vpop.f32.mrf.mxu0
    %v422 = vadd.f32 0.0, %v421
    %v423 = vpop.f32.mrf.mxu0
    %v424 = vadd.f32 0.0, %v423
    %425 = vdwg.mxu0
    %vm426 = vcmp.ge.f32.partialorder %v418, 0.0
    %vm427 = vcmp.ge.f32.partialorder %v422, 0.0
    %v428 = vmul.f32 %v120, %v418
    %v429 = vmul.f32 %v120, %v422
    %v430 = vsel %vm426, %v418, %v428
    %v431 = vsel %vm427, %v422, %v429
    %vm432 = vcmp.ge.f32.partialorder %v420, 0.0
    %vm433 = vcmp.ge.f32.partialorder %v424, 0.0
    %v434 = vstv %s55
    %v435 = vmul.f32 %v434, %v420
    %v436 = vmul.f32 %v434, %v424
    %v437 = vsel %vm432, %v420, %v435
    %v438 = vsel %vm433, %v424, %v436
    %v439 = vpack.c.bf16 %v438, %v437
    %v441 = vsel %vm73, %v439, 0
    %443 = vmatprep.subr.bf16.mxu0 0
    %444 = vmatpush1.bf16.msra.mxu0 0
    %445 = vmatprep.subr.bf16.mxu0 0
    %446 = vmatpush1.bf16.msra.mxu0 0
    %447 = vmatprep.subr.bf16.mxu0 0
    %448 = vmatpush1.bf16.msra.mxu0 0
    %449 = vmatprep.subr.bf16.mxu0 0
    %450 = vmatpush1.bf16.msra.mxu0 0
    %451 = vmatprep.subr.bf16.mxu0 0
    %452 = vmatpush1.bf16.msra.mxu0 0
    %453 = vmatprep.subr.bf16.mxu0 0
    %454 = vmatpush1.bf16.msra.mxu0 0
    %455 = vmatprep.subr.bf16.mxu0 0
    %456 = vmatpush1.bf16.msra.mxu0 0
    %457 = vmatprep.subr.bf16.mxu0 0
    %458 = vmatpush1.bf16.msra.mxu0 %v441
    %459 = vmatprep.subr.bf16.mxu0 0
    %460 = vmatpush2.bf16.msra.mxu0 0
    %461 = vmatprep.subr.bf16.mxu0 0
    %462 = vmatpush2.bf16.msra.mxu0 0
    %463 = vmatprep.subr.bf16.mxu0 0
    %464 = vmatpush2.bf16.msra.mxu0 0
    %465 = vmatprep.subr.bf16.mxu0 0
    %466 = vmatpush2.bf16.msra.mxu0 0
    %467 = vmatprep.subr.bf16.mxu0 0
    %468 = vmatpush2.bf16.msra.mxu0 0
    %469 = vmatprep.subr.bf16.mxu0 0
    %470 = vmatpush2.bf16.msra.mxu0 0
    %471 = vmatprep.subr.bf16.mxu0 0
    %472 = vmatpush2.bf16.msra.mxu0 0
    %473 = vmatprep.subr.bf16.mxu0 0
    %474 = vmatpush2.bf16.msra.mxu0 0
    %475 = vmatprep.mubr.bf16.mxu0 0
    %476 = vmatmul.mubr.bf16.gmra.mxu0 %v71
    %v477 = vpop.f32.mrf.mxu0
    %v478 = vadd.f32 0.0, %v477
    %v479 = vpop.f32.mrf.mxu0
    %v480 = vpop.f32.mrf.mxu0
    %v481 = vadd.f32 0.0, %v480
    %v482 = vpop.f32.mrf.mxu0
    %483 = vdwg.mxu0
    %vm484 = vcmp.ge.f32.partialorder %v478, 0.0
    %vm485 = vcmp.ge.f32.partialorder %v481, 0.0
    %v486 = vstv %s56
    %v487 = vmul.f32 %v486, %v478
    %v488 = vmul.f32 %v486, %v481
    %v489 = vsel %vm484, %v478, %v487
    %v490 = vsel %vm485, %v481, %v488
    %vm491 = vcmp.ge.f32.partialorder %v437, 0.0
    %vm492 = vcmp.ge.f32.partialorder %v438, 0.0
    %v493 = vmul.f32 %v486, %v437
    %v494 = vmul.f32 %v486, %v438
    %v495 = vsel %vm491, %v437, %v493
    %v496 = vsel %vm492, %v438, %v494
    %v497 = vpack.c.bf16 %v490, %v489
    %v498 = vsub.f32 %v495, %v489
    %v499 = vsub.f32 %v496, %v490
    %v500 = vmul.f32 %v137, %v498
    %v501 = vmul.f32 %v142, %v499
    %v503 = vsel %vm73, %v497, 0
    %505 = vmatprep.subr.bf16.mxu0 0
    %506 = vmatpush1.bf16.msra.mxu0 0
    %507 = vmatprep.subr.bf16.mxu0 0
    %508 = vmatpush1.bf16.msra.mxu0 0
    %509 = vmatprep.subr.bf16.mxu0 0
    %510 = vmatpush1.bf16.msra.mxu0 0
    %511 = vmatprep.subr.bf16.mxu0 0
    %512 = vmatpush1.bf16.msra.mxu0 0
    %513 = vmatprep.subr.bf16.mxu0 0
    %514 = vmatpush1.bf16.msra.mxu0 0
    %515 = vmatprep.subr.bf16.mxu0 0
    %516 = vmatpush1.bf16.msra.mxu0 0
    %517 = vmatprep.subr.bf16.mxu0 0
    %518 = vmatpush1.bf16.msra.mxu0 0
    %519 = vmatprep.subr.bf16.mxu0 0
    %520 = vmatpush1.bf16.msra.mxu0 %v503
    %521 = vmatprep.subr.bf16.mxu0 0
    %522 = vmatpush2.bf16.msra.mxu0 0
    %523 = vmatprep.subr.bf16.mxu0 0
    %524 = vmatpush2.bf16.msra.mxu0 0
    %525 = vmatprep.subr.bf16.mxu0 0
    %526 = vmatpush2.bf16.msra.mxu0 0
    %527 = vmatprep.subr.bf16.mxu0 0
    %528 = vmatpush2.bf16.msra.mxu0 0
    %529 = vmatprep.subr.bf16.mxu0 0
    %530 = vmatpush2.bf16.msra.mxu0 0
    %531 = vmatprep.subr.bf16.mxu0 0
    %532 = vmatpush2.bf16.msra.mxu0 0
    %533 = vmatprep.subr.bf16.mxu0 0
    %534 = vmatpush2.bf16.msra.mxu0 0
    %535 = vmatprep.subr.bf16.mxu0 0
    %536 = vmatpush2.bf16.msra.mxu0 0
    %537 = vmatprep.mubr.bf16.mxu0 0
    %538 = vmatmul.mubr.bf16.gmra.mxu0 %v71
    %v539 = vpop.f32.mrf.mxu0
    %v540 = vadd.f32 %v500, %v539
    %v541 = vpop.f32.mrf.mxu0
    %v542 = vpop.f32.mrf.mxu0
    %v543 = vadd.f32 %v501, %v542
    %v544 = vpop.f32.mrf.mxu0
    %545 = vdwg.mxu0
    %v546 = vpack.c.bf16 %v431, %v430
    %v547 = vpack.c.bf16 %v543, %v540
    %v548 = vld [vmem:[#allocation5] sm:$0xff]
    %v549 = vld [vmem:[#allocation5 + $0x8] sm:$0xff]
    %v550 = vld [vmem:[#allocation5 + $0x10] sm:$0xff]
    %v551 = vld [vmem:[#allocation5 + $0x18] sm:$0xff]
    %v552 = vld [vmem:[#allocation5 + $0x20] sm:$0xff]
    %v553 = vld [vmem:[#allocation5 + $0x28] sm:$0xff]
    %v554 = vld [vmem:[#allocation5 + $0x30] sm:$0xff]
    %v555 = vld [vmem:[#allocation5 + $0x38] sm:$0xff]
    %v556 = vld [vmem:[#allocation5 + $0x40] sm:$0xff]
    %v557 = vld [vmem:[#allocation5 + $0x48] sm:$0xff]
    %v558 = vld [vmem:[#allocation5 + $0x50] sm:$0xff]
    %v559 = vld [vmem:[#allocation5 + $0x58] sm:$0xff]
    %v560 = vld [vmem:[#allocation5 + $0x60] sm:$0xff]
    %v561 = vld [vmem:[#allocation5 + $0x68] sm:$0xff]
    %v562 = vld [vmem:[#allocation5 + $0x70] sm:$0xff]
    %v563 = vld [vmem:[#allocation5 + $0x78] sm:$0xff]
    %v564 = vld [vmem:[#allocation5 + $0x80] sm:$0xff]
    %v565 = vld [vmem:[#allocation5 + $0x88] sm:$0xff]
    %v566 = vld [vmem:[#allocation5 + $0x90] sm:$0xff]
    %v567 = vld [vmem:[#allocation5 + $0x98] sm:$0xff]
    %v568 = vld [vmem:[#allocation5 + $0xa0] sm:$0xff]
    %v569 = vld [vmem:[#allocation5 + $0xa8] sm:$0xff]
    %v570 = vld [vmem:[#allocation5 + $0xb0] sm:$0xff]
    %v571 = vld [vmem:[#allocation5 + $0xb8] sm:$0xff]
    %v572 = vld [vmem:[#allocation5 + $0xc0] sm:$0xff]
    %v573 = vld [vmem:[#allocation5 + $0xc8] sm:$0xff]
    %v574 = vld [vmem:[#allocation5 + $0xd0] sm:$0xff]
    %v575 = vld [vmem:[#allocation5 + $0xd8] sm:$0xff]
    %v576 = vld [vmem:[#allocation5 + $0xe0] sm:$0xff]
    %v577 = vld [vmem:[#allocation5 + $0xe8] sm:$0xff]
    %v578 = vld [vmem:[#allocation5 + $0xf0] sm:$0xff]
    %v579 = vld [vmem:[#allocation5 + $0xf8] sm:$0xff]
    %v612 = vunpack.c.l.b16 %v548
    %v613 = vunpack.c.h.b16 %v548
    %v614 = vunpack.c.l.b16 %v549
    %v615 = vunpack.c.h.b16 %v549
    %v616 = vunpack.c.l.b16 %v550
    %v617 = vunpack.c.h.b16 %v550
    %v618 = vunpack.c.l.b16 %v551
    %v619 = vunpack.c.h.b16 %v551
    %v620 = vunpack.c.l.b16 %v552
    %v621 = vunpack.c.h.b16 %v552
    %v622 = vunpack.c.l.b16 %v553
    %v623 = vunpack.c.h.b16 %v553
    %v624 = vunpack.c.l.b16 %v554
    %v625 = vunpack.c.h.b16 %v554
    %v626 = vunpack.c.l.b16 %v555
    %v627 = vunpack.c.h.b16 %v555
    %v628 = vunpack.c.l.b16 %v556
    %v629 = vunpack.c.h.b16 %v556
    %v630 = vunpack.c.l.b16 %v557
    %v631 = vunpack.c.h.b16 %v557
    %v632 = vunpack.c.l.b16 %v558
    %v633 = vunpack.c.h.b16 %v558
    %v634 = vunpack.c.l.b16 %v559
    %v635 = vunpack.c.h.b16 %v559
    %v636 = vunpack.c.l.b16 %v560
    %v637 = vunpack.c.h.b16 %v560
    %v638 = vunpack.c.l.b16 %v561
    %v639 = vunpack.c.h.b16 %v561
    %v640 = vunpack.c.l.b16 %v562
    %v641 = vunpack.c.h.b16 %v562
    %v642 = vunpack.c.l.b16 %v563
    %v643 = vunpack.c.h.b16 %v563
    %v644 = vunpack.c.l.b16 %v564
    %v645 = vunpack.c.h.b16 %v564
    %v646 = vunpack.c.l.b16 %v565
    %v647 = vunpack.c.h.b16 %v565
    %v648 = vunpack.c.l.b16 %v566
    %v649 = vunpack.c.h.b16 %v566
    %v650 = vunpack.c.l.b16 %v567
    %v651 = vunpack.c.h.b16 %v567
    %v652 = vunpack.c.l.b16 %v568
    %v653 = vunpack.c.h.b16 %v568
    %v654 = vunpack.c.l.b16 %v569
    %v655 = vunpack.c.h.b16 %v569
    %v656 = vunpack.c.l.b16 %v570
    %v657 = vunpack.c.h.b16 %v570
    %v658 = vunpack.c.l.b16 %v571
    %v659 = vunpack.c.h.b16 %v571
    %v660 = vunpack.c.l.b16 %v572
    %v661 = vunpack.c.h.b16 %v572
    %v662 = vunpack.c.l.b16 %v573
    %v663 = vunpack.c.h.b16 %v573
    %v664 = vunpack.c.l.b16 %v574
    %v665 = vunpack.c.h.b16 %v574
    %v666 = vunpack.c.l.b16 %v575
    %v667 = vunpack.c.h.b16 %v575
    %v668 = vunpack.c.l.b16 %v576
    %v669 = vunpack.c.h.b16 %v576
    %v670 = vunpack.c.l.b16 %v577
    %v671 = vunpack.c.h.b16 %v577
    %v672 = vunpack.c.l.b16 %v578
    %v673 = vunpack.c.h.b16 %v578
    %v674 = vunpack.c.l.b16 %v579
    %v675 = vunpack.c.h.b16 %v579
    %v676 = vpack.c.b16 %v614, %v612
    %v677 = vpack.c.b16 %v615, %v613
    %v678 = vpack.c.b16 %v618, %v616
    %v679 = vpack.c.b16 %v619, %v617
    %v680 = vpack.c.b16 %v622, %v620
    %v681 = vpack.c.b16 %v623, %v621
    %v682 = vpack.c.b16 %v626, %v624
    %v683 = vpack.c.b16 %v627, %v625
    %v684 = vpack.c.b16 %v630, %v628
    %v685 = vpack.c.b16 %v631, %v629
    %v686 = vpack.c.b16 %v634, %v632
    %v687 = vpack.c.b16 %v635, %v633
    %v688 = vpack.c.b16 %v638, %v636
    %v689 = vpack.c.b16 %v639, %v637
    %v690 = vpack.c.b16 %v642, %v640
    %v691 = vpack.c.b16 %v643, %v641
    %v692 = vpack.c.b16 %v646, %v644
    %v693 = vpack.c.b16 %v647, %v645
    %v694 = vpack.c.b16 %v650, %v648
    %v695 = vpack.c.b16 %v651, %v649
    %v696 = vpack.c.b16 %v654, %v652
    %v697 = vpack.c.b16 %v655, %v653
    %v698 = vpack.c.b16 %v658, %v656
    %v699 = vpack.c.b16 %v659, %v657
    %v700 = vpack.c.b16 %v662, %v660
    %v701 = vpack.c.b16 %v663, %v661
    %v702 = vpack.c.b16 %v666, %v664
    %v703 = vpack.c.b16 %v667, %v665
    %v704 = vpack.c.b16 %v670, %v668
    %v705 = vpack.c.b16 %v671, %v669
    %v706 = vpack.c.b16 %v674, %v672
    %v707 = vpack.c.b16 %v675, %v673
    %740 = vmatprep.subr.bf16.mxu0 %v691
    %741 = vmatpush1.bf16.msra.mxu0 %v690
    %742 = vmatprep.subr.bf16.mxu0 %v689
    %743 = vmatpush1.bf16.msra.mxu0 %v688
    %744 = vmatprep.subr.bf16.mxu0 %v687
    %745 = vmatpush1.bf16.msra.mxu0 %v686
    %746 = vmatprep.subr.bf16.mxu0 %v685
    %747 = vmatpush1.bf16.msra.mxu0 %v684
    %748 = vmatprep.subr.bf16.mxu0 %v683
    %749 = vmatpush1.bf16.msra.mxu0 %v682
    %750 = vmatprep.subr.bf16.mxu0 %v681
    %751 = vmatpush1.bf16.msra.mxu0 %v680
    %752 = vmatprep.subr.bf16.mxu0 %v679
    %753 = vmatpush1.bf16.msra.mxu0 %v678
    %754 = vmatprep.subr.bf16.mxu0 %v677
    %755 = vmatpush1.bf16.msra.mxu0 %v676
    %756 = vmatprep.subr.bf16.mxu0 %v707
    %757 = vmatpush2.bf16.msra.mxu0 %v706
    %758 = vmatprep.subr.bf16.mxu0 %v705
    %759 = vmatpush2.bf16.msra.mxu0 %v704
    %760 = vmatprep.subr.bf16.mxu0 %v703
    %761 = vmatpush2.bf16.msra.mxu0 %v702
    %762 = vmatprep.subr.bf16.mxu0 %v701
    %763 = vmatpush2.bf16.msra.mxu0 %v700
    %764 = vmatprep.subr.bf16.mxu0 %v699
    %765 = vmatpush2.bf16.msra.mxu0 %v698
    %766 = vmatprep.subr.bf16.mxu0 %v697
    %767 = vmatpush2.bf16.msra.mxu0 %v696
    %768 = vmatprep.subr.bf16.mxu0 %v695
    %769 = vmatpush2.bf16.msra.mxu0 %v694
    %770 = vmatprep.subr.bf16.mxu0 %v693
    %771 = vmatpush2.bf16.msra.mxu0 %v692
    %772 = vmatprep.mubr.bf16.mxu0 %v547
    %773 = vmatmul.mubr.bf16.gmra.mxu0 %v546
    %v774 = vpop.f32.mrf.mxu0
    %v775 = vadd.f32 0.0, %v774
    %v776 = vpop.f32.mrf.mxu0
    %v777 = vadd.f32 0.0, %v776
    %v778 = vpop.f32.mrf.mxu0
    %v779 = vadd.f32 0.0, %v778
    %v780 = vpop.f32.mrf.mxu0
    %v781 = vadd.f32 0.0, %v780
    %782 = vdwg.mxu0
    %vm783 = vcmp.ge.f32.partialorder %v775, 0.0
    %vm784 = vcmp.ge.f32.partialorder %v779, 0.0
    %v785 = vstv %s54
    %v786 = vmul.f32 %v785, %v775
    %v787 = vmul.f32 %v785, %v779
    %v788 = vsel %vm783, %v775, %v786
    %v789 = vsel %vm784, %v779, %v787
    %790 = vst [vmem:[%s6] sm:$0xff] %v788
    %791 = vst [vmem:[%s6 + $0x8] sm:$0x3] %v789
    %vm792 = vcmp.ge.f32.partialorder %v777, 0.0
    %vm793 = vcmp.ge.f32.partialorder %v781, 0.0
    %v794 = vmul.f32 %v486, %v777
    %v795 = vmul.f32 %v486, %v781
    %v796 = vsel %vm792, %v777, %v794
    %v797 = vsel %vm793, %v781, %v795
    %798 = vst [vmem:[%s7] sm:$0xff] %v796
    %799 = vst [vmem:[%s7 + $0x8] sm:$0x3] %v797
    // Predicated region
    $region34: #{sparse_graph_convolution.1} parent=1 // pred_check
      _
    $region35: #{sparse_graph_convolution.1} parent=1 // pred_check_branch
      %801 = sbr.rel (0) target = $region37
    $region36: #{sparse_graph_convolution.1} parent=1 // pred_region
      _
    $region37: #{sparse_graph_convolution.1} parent=1 // pred_fallthru
      _
    // Predicated region
    $region38: #{sparse_graph_convolution.1} parent=1 // pred_check
      _
    $region39: #{sparse_graph_convolution.1} parent=1 // pred_check_branch
      %803 = sbr.rel (0) target = $region41
    $region40: #{sparse_graph_convolution.1} parent=1 // pred_region
      _
    $region41: #{sparse_graph_convolution.1} parent=1 // pred_fallthru
      _
    // Predicated region
    $region42: #{sparse_graph_convolution.1} parent=1 // pred_check
      _
    $region43: #{sparse_graph_convolution.1} parent=1 // pred_check_branch
      %805 = sbr.rel (0) target = $region45
    $region44: #{sparse_graph_convolution.1} parent=1 // pred_region
      _
    $region45: #{sparse_graph_convolution.1} parent=1 // pred_fallthru
      _
    // Predicated region
    $region46: #{sparse_graph_convolution.1} parent=1 // pred_check
      _
    $region47: #{sparse_graph_convolution.1} parent=1 // pred_check_branch
      %807 = sbr.rel (0) target = $region49
    $region48: #{sparse_graph_convolution.1} parent=1 // pred_region
      _
    $region49: #{sparse_graph_convolution.1} parent=1 // pred_fallthru
      _
    %808 = vsyncpa [#allocation3], 1
    %809 = vsyncpa [#allocation4], 1

</llo_original>
